<compile_context>
chip_gen: v7x
topology: tpu7x:2x2x1
jax: 0.10.0
libtpu: 0.0.40
codegen_flags: <defaults>
</compile_context>

<pallas_src>
import jax
import jax.numpy as jnp
from jax.experimental import pallas as pl
from jax.experimental.pallas import tpu as pltpu


def _vq_argmin_kernel(x_ref, wT_ref, w2h_ref, idx_ref):
    """Nearest-codebook-row search for one batch tile.

    x_ref   : (TB, Ddim)    f32  input tile (cast to bf16 in-kernel)
    wT_ref  : (Ddim, E_pad) bf16 pre-transposed codebook (resident)
    w2h_ref : (1, E_pad)    f32  0.5*|w|^2 per column (+1e30 on padded cols)
    idx_ref : (TB, 1)       i32  argmin indices (output)
    """
    TB = x_ref.shape[0]
    E_pad = wT_ref.shape[1]

    # In-kernel cast: f32 -> bf16 hides under the matmul, halves x HBM traffic
    # vs. a separate XLA cast pass.
    x = x_ref[...].astype(jnp.bfloat16)

    # Canonical (TB,K)x(K,N) contraction on the MXU with f32 accumulation.
    xw = jax.lax.dot_general(
        x, wT_ref[...],
        dimension_numbers=(((1,), (0,)), ((), ())),
        preferred_element_type=jnp.float32)                  # (TB, E_pad)

    # scores[b,e] = 0.5*|w_e|^2 - <x_b, w_e>
    # (argmin-equivalent to |x|^2 + |w|^2 - 2<x,w>; the |x|^2 row constant and
    #  the positive 2x scale are both argmin-invariant)
    scores = w2h_ref[...] - xw                               # (TB, E_pad) f32

    # First-index argmin (matches torch.argmin tie-breaking).
    min_val = jnp.min(scores, axis=1, keepdims=True)         # (TB, 1)
    col_ids = jax.lax.broadcasted_iota(jnp.int32, (TB, E_pad), 1)
    idx = jnp.min(jnp.where(scores <= min_val, col_ids, E_pad),
                  axis=1, keepdims=True)                     # (TB, 1) i32
    idx_ref[...] = idx


@jax.jit
def vector_quantizer_forward(inputs, embeddings, commitment_cost):
    """Forward of VectorQuantizer_Instance_Vr (vq_rotate=False branch).

    inputs:     (B, C, D, H, W) f32, with C*D*H*W == embedding_dim
    embeddings: (E, embedding_dim) f32 codebook
    returns (loss, quantized, perplexity, encodings) like the PyTorch module.
    """
    input_shape = inputs.shape
    B = input_shape[0]
    Ddim = 1
    for s in input_shape[1:]:
        Ddim *= int(s)
    E, Ddim_w = embeddings.shape
    assert Ddim_w == Ddim, "embedding_dim must equal C*D*H*W"

    # torch .view(B, -1) on a contiguous NCDHW tensor == row-major reshape.
    flat_input = inputs.reshape(B, Ddim)

    # --- codebook lane padding: padded columns must never win the argmin ---
    E_pad = ((E + 127) // 128) * 128

    # --- batch tiling: codebook resident, stream batch tiles of <=256 rows ---
    if B <= 256:
        TB, B_pad = B, B                      # single tile == full array dims
    else:
        TB = 256                               # fills the 256x256 MXU (v6e/v7x)
        B_pad = ((B + TB - 1) // TB) * TB
    x_in = flat_input                          # f32 straight in; cast in-kernel
    if B_pad != B:
        x_in = jnp.pad(flat_input, ((0, B_pad - B), (0, 0)))
    n_tiles = B_pad // TB

    # Pre-transposed bf16 codebook in the (K, N) layout the MXU wants; the
    # one-time XLA transpose is amortized over all batch tiles.
    wT = embeddings.T.astype(jnp.bfloat16)                   # (Ddim, E)
    if E_pad != E:
        wT = jnp.pad(wT, ((0, 0), (0, E_pad - E)))
    # 0.5*|w|^2 precomputed once in f32 (cacheable alongside the codebook);
    # padded columns get +1e30 so they always lose the argmin.
    w2h = 0.5 * jnp.sum(embeddings * embeddings, axis=1, dtype=jnp.float32)
    if E_pad != E:
        w2h = jnp.pad(w2h, (0, E_pad - E), constant_values=1e30)
    w2h = w2h.reshape(1, E_pad)

    # VMEM budget from actual buffer arithmetic (default pipeliner keeps two
    # copies of every BlockSpec operand) + headroom for the (TB,E_pad) scores.
    vmem_needed = (2 * TB * Ddim * 4          # x tiles (f32, double-buffered)
                   + 2 * Ddim * E_pad * 2     # resident codebook (bf16, 2x)
                   + 2 * E_pad * 4            # w2h
                   + 2 * TB * 4               # idx out
                   + 2 * TB * E_pad * 4)      # score tile / temporaries
    vmem_limit = int(min(max(2 * vmem_needed, 16 * 1024 * 1024),
                         64 * 1024 * 1024))   # cap safe for v7x (64 MiB/TC)

    cost = pl.CostEstimate(
        flops=2 * B_pad * E_pad * Ddim,
        transcendentals=0,
        bytes_accessed=(B_pad * Ddim * 4      # x f32
                        + Ddim * E_pad * 2    # codebook bf16
                        + E_pad * 4           # w2h
                        + B_pad * 4),         # indices out
    )

    idx_pad = pl.pallas_call(
        _vq_argmin_kernel,
        grid=(n_tiles,),
        in_specs=[
            pl.BlockSpec((TB, Ddim), lambda i: (i, 0),
                         memory_space=pltpu.MemorySpace.VMEM),
            pl.BlockSpec((Ddim, E_pad), lambda i: (0, 0),    # resident codebook
                         memory_space=pltpu.MemorySpace.VMEM),
            pl.BlockSpec((1, E_pad), lambda i: (0, 0),
                         memory_space=pltpu.MemorySpace.VMEM),
        ],
        out_specs=pl.BlockSpec((TB, 1), lambda i: (i, 0),
                               memory_space=pltpu.MemorySpace.VMEM),
        out_shape=jax.ShapeDtypeStruct((B_pad, 1), jnp.int32),
        compiler_params=pltpu.CompilerParams(
            dimension_semantics=("parallel",),                # 2 TCs on v7x
            vmem_limit_bytes=vmem_limit,
        ),
        cost_estimate=cost,
    )(x_in, wT, w2h)

    indices = idx_pad[:B, 0]                                  # drop padded rows

    # One-hot encodings rebuilt from indices in the wrapper (no large (B,E)
    # f32 stream written by the kernel); row gather reproduces exact f32
    # codebook entries for the quantized output.
    encodings = (indices[:, None] ==
                 jnp.arange(E, dtype=indices.dtype)[None, :]).astype(jnp.float32)
    quant_flat = jnp.take(embeddings, indices, axis=0)        # (B, Ddim)
    quantized = quant_flat.reshape(input_shape)               # straight-through
                                                              # forward value

    # q_latent_loss and e_latent_loss are numerically identical in forward.
    diff = quant_flat - flat_input
    mse = jnp.mean(diff * diff)
    loss = mse + commitment_cost * mse

    avg_probs = jnp.mean(encodings, axis=0)
    perplexity = jnp.exp(-jnp.sum(avg_probs * jnp.log(avg_probs + 1e-10)))

    return loss, quantized, perplexity, encodings


if __name__ == "__main__":
    # Small shapes consistent with the module: embedding_dim must equal C*D*H*W.
    B, C, D, H, W = 2, 4, 4, 4, 4
    num_embeddings = 128
    embedding_dim = C * D * H * W   # 256
    commitment_cost = 0.25

    key = jax.random.PRNGKey(0)
    k_in, k_emb = jax.random.split(key)

    inputs = jax.random.normal(k_in, (B, C, D, H, W), dtype=jnp.float32)

    # Deterministic init matching: uniform_(-1/num_embeddings, +1/num_embeddings)
    limit = 1.0 / num_embeddings
    embeddings = jax.random.uniform(
        k_emb, (num_embeddings, embedding_dim),
        minval=-limit, maxval=limit, dtype=jnp.float32)

    loss, quantized, perplexity, encodings = vector_quantizer_forward(
        inputs, embeddings, commitment_cost)
    jax.block_until_ready((loss, quantized, perplexity, encodings))

    assert quantized.shape == inputs.shape
    assert encodings.shape == (B, num_embeddings)
    assert bool(jnp.all(jnp.sum(encodings, axis=1) == 1.0))  # valid one-hots
    print("KERNEL_OK")
</pallas_src>

<mosaic_0001>
module attributes {stable_mosaic.version = 11 : i64} {
  func.func @_vq_argmin_kernel(%arg0: i32, %arg1: memref<2x256xf32, #tpu.memory_space<vmem>>, %arg2: memref<256x128xbf16, #tpu.memory_space<vmem>>, %arg3: memref<1x128xf32, #tpu.memory_space<vmem>>, %arg4: memref<2x1xi32, #tpu.memory_space<vmem>>) attributes {dimension_semantics = [#tpu.dimension_semantics<parallel>], iteration_bounds = array<i64: 1>, scalar_prefetch = 0 : i64, scratch_operands = 0 : i64, tpu.core_type = #tpu.core_type<tc>, window_params = [{transform_indices = @transform_0, window_bounds = array<i64: 2, 256>}, {pipeline_mode = #tpu.pipeline_mode<synchronous>, transform_indices = @transform_1, window_bounds = array<i64: 256, 128>}, {pipeline_mode = #tpu.pipeline_mode<synchronous>, transform_indices = @transform_2, window_bounds = array<i64: 1, 128>}, {transform_indices = @transform_3, window_bounds = array<i64: 2, 1>}]} {
    %c0 = arith.constant 0 : index
    %c0_0 = arith.constant 0 : index
    %0 = vector.load %arg1[%c0, %c0_0] : memref<2x256xf32, #tpu.memory_space<vmem>>, vector<2x256xf32>
    %1 = arith.truncf %0 : vector<2x256xf32> to vector<2x256xbf16>
    %c0_1 = arith.constant 0 : index
    %c0_2 = arith.constant 0 : index
    %2 = vector.load %arg2[%c0_1, %c0_2] : memref<256x128xbf16, #tpu.memory_space<vmem>>, vector<256x128xbf16>
    %cst = arith.constant dense<0.000000e+00> : vector<2x128xf32>
    %3 = tpu.matmul %1, %2, %cst {dimension_numbers = #tpu.dot_dimension_numbers<[1], [0], [0], [1], [0, 0, 1, 1], [], []>} : vector<2x256xbf16>, vector<256x128xbf16>, vector<2x128xf32> -> vector<2x128xf32>
    %c0_3 = arith.constant 0 : index
    %c0_4 = arith.constant 0 : index
    %4 = vector.load %arg3[%c0_3, %c0_4] : memref<1x128xf32, #tpu.memory_space<vmem>>, vector<1x128xf32>
    %5 = vector.broadcast %4 : vector<1x128xf32> to vector<2x128xf32>
    %6 = arith.subf %5, %3 : vector<2x128xf32>
    %cst_5 = arith.constant dense<0x7F800000> : vector<2xf32>
    %7 = vector.multi_reduction <minimumf>, %6, %cst_5 [1] : vector<2x128xf32> to vector<2xf32>
    %8 = vector.shape_cast %7 : vector<2xf32> to vector<2x1xf32>
    %9 = tpu.iota {dimensions = array<i32: 1>} : vector<2x128xi32>
    %10 = vector.broadcast %8 : vector<2x1xf32> to vector<2x128xf32>
    %11 = arith.cmpf ole, %6, %10 : vector<2x128xf32>
    %c128_i32 = arith.constant 128 : i32
    %12 = vector.broadcast %c128_i32 : i32 to vector<2x128xi32>
    %13 = arith.select %11, %9, %12 : vector<2x128xi1>, vector<2x128xi32>
    %cst_6 = arith.constant dense<2147483647> : vector<2xi32>
    %14 = vector.multi_reduction <minsi>, %13, %cst_6 [1] : vector<2x128xi32> to vector<2xi32>
    %15 = vector.shape_cast %14 : vector<2xi32> to vector<2x1xi32>
    %c0_7 = arith.constant 0 : index
    %c0_8 = arith.constant 0 : index
    %16 = vector.load %arg4[%c0_7, %c0_8] : memref<2x1xi32, #tpu.memory_space<vmem>>, vector<2x1xi32>
    tpu.vector_store %arg4[%c0_7, %c0_8], %15 {strides = array<i32>} : memref<2x1xi32, #tpu.memory_space<vmem>>, vector<2x1xi32>,
    return
  }
  func.func @transform_0(%arg0: i32) -> (i32, i32) {
    %c0_i32 = arith.constant 0 : i32
    %c0_i32_0 = arith.constant 0 : i32
    return %arg0, %c0_i32 : i32, i32
  }
  func.func @transform_1(%arg0: i32) -> (i32, i32) {
    %c0_i32 = arith.constant 0 : i32
    %c0_i32_0 = arith.constant 0 : i32
    %c0_i32_1 = arith.constant 0 : i32
    return %c0_i32, %c0_i32_0 : i32, i32
  }
  func.func @transform_2(%arg0: i32) -> (i32, i32) {
    %c0_i32 = arith.constant 0 : i32
    %c0_i32_0 = arith.constant 0 : i32
    %c0_i32_1 = arith.constant 0 : i32
    return %c0_i32, %c0_i32_0 : i32, i32
  }
  func.func @transform_3(%arg0: i32) -> (i32, i32) {
    %c0_i32 = arith.constant 0 : i32
    %c0_i32_0 = arith.constant 0 : i32
    return %arg0, %c0_i32 : i32, i32
  }
}

</mosaic_0001>

<llo_original>
// kernel: vector_quantizer_forward.1
$region0: #{vector_quantizer_forward.1}
  #allocation0 [shape = 'u32[]', space=smem, size = 0x4, offset = 0x4, fixed_abs, tag = 'smem constant byte address 0x4 - core index']
  #allocation1 [shape = 'u32[144,128]{1,0:T(1,128)}', space=vmem, size = 0x12000, scoped, tag = 'internal scratch']
  %s0 = inlined_call_operand.vmem [shape: f32[2,256], index: 0, kind: input, shape index: {}]
  %s1 = inlined_call_operand.vmem [shape: bf16[256,128], index: 1, kind: input, shape index: {}]
  %s2 = inlined_call_operand.vmem [shape: f32[1,128], index: 2, kind: input, shape index: {}]
  %s3 = inlined_call_operand.vmem [shape: s32[2,1], index: 3, kind: output, shape index: {}]
  %s4 = sld [smem:[#allocation0]]
  $region22: #{vector_quantizer_forward.1} parent=0
    _
  %s6 = ssub.s32 1, %s4
  %s7 = scalar_select 0, %s6, %s4
  // Predicated region
  $region2: #{vector_quantizer_forward.1} parent=0 // pred_check
    _
  $region3: #{vector_quantizer_forward.1} parent=0 // pred_check_branch
    %9 = sbr.rel (0) target = $region5
  $region4: #{vector_quantizer_forward.1} parent=0 // pred_region
    _
  $region5: #{vector_quantizer_forward.1} parent=0 // pred_fallthru
    _
  // Predicated region
  $region6: #{vector_quantizer_forward.1} parent=0 // pred_check
    _
  $region7: #{vector_quantizer_forward.1} parent=0 // pred_check_branch
    %11 = sbr.rel (0) target = $region9
  $region8: #{vector_quantizer_forward.1} parent=0 // pred_region
    _
  $region9: #{vector_quantizer_forward.1} parent=0 // pred_fallthru
    _
  // Predicated region
  $region10: #{vector_quantizer_forward.1} parent=0 // pred_check
    _
  $region11: #{vector_quantizer_forward.1} parent=0 // pred_check_branch
    %13 = sbr.rel (0) target = $region13
  $region12: #{vector_quantizer_forward.1} parent=0 // pred_region
    _
  $region13: #{vector_quantizer_forward.1} parent=0 // pred_fallthru
    _
  %v15 = vld [vmem:[%s0] sm:$0xf]
  %v18 = vunpack.c.l.s4 1983009808
  %v19 = vunpack.c.0.s8 %v18
  %v20 = vlaneseq
  %v21 = vshrl.u32 %v20, 7
  %v22 = vsub.s32 %v19, %v21
  %v23 = vrot.slane %v15, %v22
  %v24 = vcombine.high %v23, %v23
  %v27 = vpack.c.bf16 %v23, %v23
  %v28 = vpack.c.bf16 %v24, %v24
  %v29 = vld [vmem:[%s1] sm:$0xf]
  %v30 = vld [vmem:[%s1 + $0x4] sm:$0xf]
  %v31 = vld [vmem:[%s1 + $0x8] sm:$0xf]
  %v32 = vld [vmem:[%s1 + $0xc] sm:$0xf]
  %v33 = vld [vmem:[%s1 + $0x10] sm:$0xf]
  %v34 = vld [vmem:[%s1 + $0x14] sm:$0xf]
  %v35 = vld [vmem:[%s1 + $0x18] sm:$0xf]
  %v36 = vld [vmem:[%s1 + $0x1c] sm:$0xf]
  %v37 = vld [vmem:[%s1 + $0x20] sm:$0xf]
  %v38 = vld [vmem:[%s1 + $0x24] sm:$0xf]
  %v39 = vld [vmem:[%s1 + $0x28] sm:$0xf]
  %v40 = vld [vmem:[%s1 + $0x2c] sm:$0xf]
  %v41 = vld [vmem:[%s1 + $0x30] sm:$0xf]
  %v42 = vld [vmem:[%s1 + $0x34] sm:$0xf]
  %v43 = vld [vmem:[%s1 + $0x38] sm:$0xf]
  %v44 = vld [vmem:[%s1 + $0x3c] sm:$0xf]
  %v45 = vld [vmem:[%s1 + $0x40] sm:$0xf]
  %v46 = vld [vmem:[%s1 + $0x44] sm:$0xf]
  %v47 = vld [vmem:[%s1 + $0x48] sm:$0xf]
  %v48 = vld [vmem:[%s1 + $0x4c] sm:$0xf]
  %v49 = vld [vmem:[%s1 + $0x50] sm:$0xf]
  %v50 = vld [vmem:[%s1 + $0x54] sm:$0xf]
  %v51 = vld [vmem:[%s1 + $0x58] sm:$0xf]
  %v52 = vld [vmem:[%s1 + $0x5c] sm:$0xf]
  %v53 = vld [vmem:[%s1 + $0x60] sm:$0xf]
  %v54 = vld [vmem:[%s1 + $0x64] sm:$0xf]
  %v55 = vld [vmem:[%s1 + $0x68] sm:$0xf]
  %v56 = vld [vmem:[%s1 + $0x6c] sm:$0xf]
  %v57 = vld [vmem:[%s1 + $0x70] sm:$0xf]
  %v58 = vld [vmem:[%s1 + $0x74] sm:$0xf]
  %v59 = vld [vmem:[%s1 + $0x78] sm:$0xf]
  %v60 = vld [vmem:[%s1 + $0x7c] sm:$0xf]
  %v93 = vunpack.c.l.b16 %v29
  %v94 = vunpack.c.l.b16 %v30
  %v95 = vunpack.c.l.b16 %v31
  %v96 = vunpack.c.l.b16 %v32
  %v97 = vunpack.c.l.b16 %v33
  %v98 = vunpack.c.l.b16 %v34
  %v99 = vunpack.c.l.b16 %v35
  %v100 = vunpack.c.l.b16 %v36
  %v101 = vunpack.c.l.b16 %v37
  %v102 = vunpack.c.l.b16 %v38
  %v103 = vunpack.c.l.b16 %v39
  %v104 = vunpack.c.l.b16 %v40
  %v105 = vunpack.c.l.b16 %v41
  %v106 = vunpack.c.l.b16 %v42
  %v107 = vunpack.c.l.b16 %v43
  %v108 = vunpack.c.l.b16 %v44
  %v109 = vunpack.c.l.b16 %v45
  %v110 = vunpack.c.l.b16 %v46
  %v111 = vunpack.c.l.b16 %v47
  %v112 = vunpack.c.l.b16 %v48
  %v113 = vunpack.c.l.b16 %v49
  %v114 = vunpack.c.l.b16 %v50
  %v115 = vunpack.c.l.b16 %v51
  %v116 = vunpack.c.l.b16 %v52
  %v117 = vunpack.c.l.b16 %v53
  %v118 = vunpack.c.l.b16 %v54
  %v119 = vunpack.c.l.b16 %v55
  %v120 = vunpack.c.l.b16 %v56
  %v121 = vunpack.c.l.b16 %v57
  %v122 = vunpack.c.l.b16 %v58
  %v123 = vunpack.c.l.b16 %v59
  %v124 = vunpack.c.l.b16 %v60
  %v125 = vpack.c.b16 %v94, %v93
  %v126 = vpack.c.b16 %v96, %v95
  %v127 = vpack.c.b16 %v98, %v97
  %v128 = vpack.c.b16 %v100, %v99
  %v129 = vpack.c.b16 %v102, %v101
  %v130 = vpack.c.b16 %v104, %v103
  %v131 = vpack.c.b16 %v106, %v105
  %v132 = vpack.c.b16 %v108, %v107
  %v133 = vpack.c.b16 %v110, %v109
  %v134 = vpack.c.b16 %v112, %v111
  %v135 = vpack.c.b16 %v114, %v113
  %v136 = vpack.c.b16 %v116, %v115
  %v137 = vpack.c.b16 %v118, %v117
  %v138 = vpack.c.b16 %v120, %v119
  %v139 = vpack.c.b16 %v122, %v121
  %v140 = vpack.c.b16 %v124, %v123
  %157 = vmatprep.subr.bf16.mxu0 0
  %158 = vmatpush1.bf16.msra.mxu0 %v125
  %159 = vmatprep.subr.bf16.mxu0 0
  %160 = vmatpush1.bf16.msra.mxu0 %v126
  %161 = vmatprep.subr.bf16.mxu0 0
  %162 = vmatpush1.bf16.msra.mxu0 %v127
  %163 = vmatprep.subr.bf16.mxu0 0
  %164 = vmatpush1.bf16.msra.mxu0 %v128
  %165 = vmatprep.subr.bf16.mxu0 0
  %166 = vmatpush1.bf16.msra.mxu0 %v129
  %167 = vmatprep.subr.bf16.mxu0 0
  %168 = vmatpush1.bf16.msra.mxu0 %v130
  %169 = vmatprep.subr.bf16.mxu0 0
  %170 = vmatpush1.bf16.msra.mxu0 %v131
  %171 = vmatprep.subr.bf16.mxu0 0
  %172 = vmatpush1.bf16.msra.mxu0 %v132
  %173 = vmatprep.subr.bf16.mxu0 0
  %174 = vmatpush1.bf16.msra.mxu0 %v133
  %175 = vmatprep.subr.bf16.mxu0 0
  %176 = vmatpush1.bf16.msra.mxu0 %v134
  %177 = vmatprep.subr.bf16.mxu0 0
  %178 = vmatpush1.bf16.msra.mxu0 %v135
  %179 = vmatprep.subr.bf16.mxu0 0
  %180 = vmatpush1.bf16.msra.mxu0 %v136
  %181 = vmatprep.subr.bf16.mxu0 0
  %182 = vmatpush1.bf16.msra.mxu0 %v137
  %183 = vmatprep.subr.bf16.mxu0 0
  %184 = vmatpush1.bf16.msra.mxu0 %v138
  %185 = vmatprep.subr.bf16.mxu0 0
  %186 = vmatpush1.bf16.msra.mxu0 %v139
  %187 = vmatprep.subr.bf16.mxu0 0
  %188 = vmatpush1.bf16.msra.mxu0 %v140
  %189 = vmatprep.mubr.bf16.mxu0 %v28
  %190 = vmatmul.mubr.bf16.gmra.mrb[0].mxu0 %v27
  %v191 = vpop.f32.mrb[0].mxu0
  %v192 = vadd.f32 0.0, %v191
  %v193 = vpop.f32.mrb[0].mxu0
  %v194 = vpop.f32.mrb[0].mxu0
  %v195 = vpop.f32.mrb[0].mxu0
  %196 = vdwg.mxu0
  %v197 = vld [vmem:[%s2] sm:$0x1]
  %v199 = vlaneseq
  %v200 = vshrl.u32 %v199, 7
  %v201 = vsub.s32 0, %v200
  %v202 = vrot.slane %v197, %v201
  %v204 = vsub.f32 %v202, %v192
  %vm205 = vcmask 1041408
  %v206 = vsel %vm205, %v204, inf
  %207 = vmin.xlane.f32.xlu0 %v206
  %v208 = vpop.xlane.xlu0 %207
  %v209 = vlaneseq
  %v210 = vand.u32 %v209, 127
  %vm211 = vcmp.le.f32.partialorder %v204, %v208
  %v212 = vsel %vm211, %v210, 128
  %v213 = vsel %vm205, %v212, 2147483647
  %v214 = vand.u32 %v213, 65535
  %v215 = vshra.s32 %v213, 16
  %v216 = vcvt.s32.f32 %v214
  %v217 = vcvt.s32.f32 %v215
  %218 = vmin.xlane.f32.xlu0 %v217
  %v219 = vpop.xlane.xlu0 %218
  %vm220 = vcmp.eq.f32.partialorder %v217, %v219
  %v221 = vsel %vm220, %v216, inf
  %222 = vmin.xlane.f32.xlu0 %v221
  %v223 = vpop.xlane.xlu0 %222
  %v224 = vcvt.f32.s32 %v223
  %v225 = vcvt.f32.s32 %v219
  %v226 = vshll.u32 %v225, 16
  %v227 = vadd.s32 %v226, %v224
  %vm228 = vcmask 1024
  %229 = vst.msk [vmem:[%s3] sm:$0x3] %vm228, %v227
  // Predicated region
  $region14: #{vector_quantizer_forward.1} parent=0 // pred_check
    _
  $region15: #{vector_quantizer_forward.1} parent=0 // pred_check_branch
    %231 = sbr.rel (0) target = $region17
  $region16: #{vector_quantizer_forward.1} parent=0 // pred_region
    _
  $region17: #{vector_quantizer_forward.1} parent=0 // pred_fallthru
    _
  // Predicated region
  $region18: #{vector_quantizer_forward.1} parent=0 // pred_check
    _
  $region19: #{vector_quantizer_forward.1} parent=0 // pred_check_branch
    %233 = sbr.rel (0) target = $region21
  $region20: #{vector_quantizer_forward.1} parent=0 // pred_region
    _
  $region21: #{vector_quantizer_forward.1} parent=0 // pred_fallthru
    _

</llo_original>
